<compile_context>
chip_gen: v7x
topology: tpu7x:2x2x1
jax: 0.10.0
libtpu: 0.0.40
codegen_flags: <defaults>
</compile_context>

<pallas_src>
import functools

import jax
import jax.numpy as jnp
from jax.experimental import pallas as pl
from jax.experimental.pallas import tpu as pltpu


def _round_up(x, m):
    return ((x + m - 1) // m) * m


def _pe_kernel(off_ref, msk_ref, sel_ref, cls_ref, whi_ref, wlo_ref, out_ref,
               *, max_rel: int):
    # off_ref/msk_ref: (TR, G) int32
    # sel_ref: (G, G*C) bf16   ones-selector (block structure), resident
    # cls_ref: (1, G*C) bf16   class id (k % C) per column, resident
    # whi/wlo: (G*C, G*E) bf16 hi/lo halves of block-diagonal (W^T + bias), resident
    # out_ref: (TR, G*E)       lane-dense output slab
    off = off_ref[...]
    msk = msk_ref[...]

    # d in [0, 2*max_rel+1]; exact in bf16 because 2*max_rel+1 <= 255.
    d = jnp.clip(off + max_rel, 0, 2 * max_rel) * msk \
        + (1 - msk) * (2 * max_rel + 1)                         # (TR, G) int32

    # Expand d across its group's C-wide column block:
    # d_exp[r, j*C + c] = d[r, j].  Exact integer arithmetic in bf16.
    d_exp = jnp.dot(d.astype(jnp.bfloat16), sel_ref[...],
                    preferred_element_type=jnp.float32
                    ).astype(jnp.bfloat16)                      # (TR, G*C)

    # bf16 compare/select; exact since all values are integers <= 255.
    # (v5e has no bf16 VALU -> minor unpack cost there, but correctness is
    # unaffected and the bf16-MXU win dominates.)
    onehot = (d_exp == cls_ref[...]).astype(jnp.bfloat16)       # (TR, G*C)

    # Block-diagonal contraction.  Each one-hot row selects exactly one weight
    # row per block, so hi + lo (accumulated in f32) reconstructs the f32
    # folded weight to ~2^-16 relative error.
    acc = jnp.dot(onehot, whi_ref[...], preferred_element_type=jnp.float32)
    acc = acc + jnp.dot(onehot, wlo_ref[...], preferred_element_type=jnp.float32)
    out_ref[...] = acc.astype(out_ref.dtype)


def positional_encodings(offset, mask, weight, bias, *, max_relative_feature=32,
                         tile_rows=32768, out_dtype=jnp.float32):
    """offset, mask: int arrays (B, L, K). weight: (out, in) like nn.Linear.

    Returns an `out_dtype` array of shape (B, L, K, num_embeddings).
    """
    B, L, K = offset.shape
    N = B * L * K
    C = 2 * max_relative_feature + 2
    E = weight.shape[0]
    assert weight.shape == (E, C)
    # bf16 exactness of the integer / one-hot path requires class ids <= 255.
    assert 2 * max_relative_feature + 1 <= 255, "bf16 one-hot path needs <= 255 classes"

    # Rows packed per lane-dense output row (G*E == 128 when E divides 128).
    G = max(1, 128 // E)
    n_groups = -(-N // G)

    # Group-rows per tile: large (amortize ~0.35 us/step), multiple of 8.
    # ~15 MiB/step with bf16 intermediates at tr=4096 -> fits the 32 MiB scoped
    # VMEM default on v5e/v6e/v7x.
    tr = max(8, (tile_rows // G) // 8 * 8)
    tr = min(tr, _round_up(n_groups, 8))
    # Keep >= 2 grid steps when there is enough work so the "parallel" axis can
    # shard across the two v7x TensorCores.
    if n_groups > 8 and _round_up(n_groups, tr) // tr < 2:
        tr = max(8, _round_up(-(-n_groups // 2), 8))
    n_groups_pad = _round_up(n_groups, tr)
    n_pad = n_groups_pad * G

    # Padded rows get offset=0, mask=0 -> class 2*max_rel+1 (valid), sliced off.
    off2 = jnp.pad(offset.reshape(-1).astype(jnp.int32),
                   (0, n_pad - N)).reshape(n_groups_pad, G)
    msk2 = jnp.pad(mask.reshape(-1).astype(jnp.int32),
                   (0, n_pad - N)).reshape(n_groups_pad, G)

    eye = jnp.eye(G, dtype=jnp.float32)
    sel = jnp.kron(eye, jnp.ones((1, C), jnp.float32)).astype(jnp.bfloat16)   # (G, G*C)
    cls = jnp.tile(jnp.arange(C, dtype=jnp.float32), G)[None, :].astype(jnp.bfloat16)
    # Bias folded into the weight (exact: each one-hot row has one 1 per block),
    # then split hi/lo so two bf16 MXU passes reproduce the f32 weight ~exactly.
    w_fold = weight.astype(jnp.float32).T + bias.astype(jnp.float32)[None, :]  # (C, E)
    w_big = jnp.kron(eye, w_fold)                                              # (G*C, G*E)
    w_hi = w_big.astype(jnp.bfloat16)
    w_lo = (w_big - w_hi.astype(jnp.float32)).astype(jnp.bfloat16)

    grid = (n_groups_pad // tr,)
    out = pl.pallas_call(
        functools.partial(_pe_kernel, max_rel=max_relative_feature),
        out_shape=jax.ShapeDtypeStruct((n_groups_pad, G * E), out_dtype),
        grid_spec=pltpu.PrefetchScalarGridSpec(
            num_scalar_prefetch=0,
            grid=grid,
            in_specs=[
                pl.BlockSpec((tr, G), lambda i: (i, 0)),
                pl.BlockSpec((tr, G), lambda i: (i, 0)),
                pl.BlockSpec((G, G * C), lambda i: (0, 0)),
                pl.BlockSpec((1, G * C), lambda i: (0, 0)),
                pl.BlockSpec((G * C, G * E), lambda i: (0, 0)),
                pl.BlockSpec((G * C, G * E), lambda i: (0, 0)),
            ],
            out_specs=pl.BlockSpec((tr, G * E), lambda i: (i, 0)),
        ),
        compiler_params=pltpu.CompilerParams(
            dimension_semantics=("parallel",),
            vmem_limit_bytes=32 * 1024 * 1024,
        ),
    )(off2, msk2, sel, cls, w_hi, w_lo)

    # (n_groups_pad, G*E) -> (n_pad, E) is a contiguous row-major reshape.
    return out.reshape(n_pad, E)[:N].reshape(B, L, K, E)


def _reference(offset, mask, weight, bias, max_rel=32):
    d = jnp.clip(offset + max_rel, 0, 2 * max_rel) * mask \
        + (1 - mask) * (2 * max_rel + 1)
    onehot = jax.nn.one_hot(d, 2 * max_rel + 2, dtype=jnp.float32)
    return onehot @ weight.astype(jnp.float32).T + bias.astype(jnp.float32)


if __name__ == "__main__":
    num_embeddings = 16
    max_relative_feature = 32
    num_classes = 2 * max_relative_feature + 2   # 66

    B, L, K = 2, 16, 8

    key = jax.random.PRNGKey(0)
    k_off, k_mask, k_w, k_b = jax.random.split(key, 4)

    # offsets in [-40, 40], binary mask
    offset = jax.random.randint(k_off, (B, L, K), -40, 41, dtype=jnp.int32)
    mask = jax.random.randint(k_mask, (B, L, K), 0, 2, dtype=jnp.int32)

    # deterministic Linear params (PyTorch layout: (out_features, in_features))
    weight = (jax.random.normal(k_w, (num_embeddings, num_classes), jnp.float32)
              * 0.05)
    bias = jax.random.normal(k_b, (num_embeddings,), jnp.float32) * 0.01

    out = positional_encodings(offset, mask, weight, bias,
                               max_relative_feature=max_relative_feature)
    out = jax.block_until_ready(out)

    ref = _reference(offset, mask, weight, bias, max_relative_feature)
    assert out.shape == (B, L, K, num_embeddings)
    # hi/lo bf16 weight split keeps relative error ~2^-16; tolerances cover it.
    assert jnp.allclose(out, ref, atol=1e-5, rtol=2e-5)

    print("KERNEL_OK")
</pallas_src>

<mosaic_0001>
module attributes {stable_mosaic.version = 11 : i64} {
  func.func @_pe_kernel(%arg0: i32, %arg1: memref<16x8xi32, #tpu.memory_space<vmem>>, %arg2: memref<16x8xi32, #tpu.memory_space<vmem>>, %arg3: memref<8x528xbf16, #tpu.memory_space<vmem>>, %arg4: memref<1x528xbf16, #tpu.memory_space<vmem>>, %arg5: memref<528x128xbf16, #tpu.memory_space<vmem>>, %arg6: memref<528x128xbf16, #tpu.memory_space<vmem>>, %arg7: memref<16x128xf32, #tpu.memory_space<vmem>>) attributes {dimension_semantics = [#tpu.dimension_semantics<parallel>], iteration_bounds = array<i64: 2>, scalar_prefetch = 0 : i64, scratch_operands = 0 : i64, tpu.core_type = #tpu.core_type<tc>, window_params = [{transform_indices = @transform_0, window_bounds = array<i64: 16, 8>}, {transform_indices = @transform_1, window_bounds = array<i64: 16, 8>}, {pipeline_mode = #tpu.pipeline_mode<synchronous>, transform_indices = @transform_2, window_bounds = array<i64: 8, 528>}, {pipeline_mode = #tpu.pipeline_mode<synchronous>, transform_indices = @transform_3, window_bounds = array<i64: 1, 528>}, {pipeline_mode = #tpu.pipeline_mode<synchronous>, transform_indices = @transform_4, window_bounds = array<i64: 528, 128>}, {pipeline_mode = #tpu.pipeline_mode<synchronous>, transform_indices = @transform_5, window_bounds = array<i64: 528, 128>}, {transform_indices = @transform_6, window_bounds = array<i64: 16, 128>}]} {
    %c0 = arith.constant 0 : index
    %c0_0 = arith.constant 0 : index
    %0 = vector.load %arg1[%c0, %c0_0] : memref<16x8xi32, #tpu.memory_space<vmem>>, vector<16x8xi32>
    %c0_1 = arith.constant 0 : index
    %c0_2 = arith.constant 0 : index
    %1 = vector.load %arg2[%c0_1, %c0_2] : memref<16x8xi32, #tpu.memory_space<vmem>>, vector<16x8xi32>
    %c32_i32 = arith.constant 32 : i32
    %2 = vector.broadcast %c32_i32 : i32 to vector<16x8xi32>
    %3 = arith.addi %0, %2 : vector<16x8xi32>
    %c0_i32 = arith.constant 0 : i32
    %c64_i32 = arith.constant 64 : i32
    %4 = vector.broadcast %c0_i32 : i32 to vector<16x8xi32>
    %5 = arith.maxsi %4, %3 : vector<16x8xi32>
    %6 = vector.broadcast %c64_i32 : i32 to vector<16x8xi32>
    %7 = arith.minsi %6, %5 : vector<16x8xi32>
    %8 = arith.muli %7, %1 : vector<16x8xi32>
    %c1_i32 = arith.constant 1 : i32
    %9 = vector.broadcast %c1_i32 : i32 to vector<16x8xi32>
    %10 = arith.subi %9, %1 : vector<16x8xi32>
    %c65_i32 = arith.constant 65 : i32
    %11 = vector.broadcast %c65_i32 : i32 to vector<16x8xi32>
    %12 = arith.muli %10, %11 : vector<16x8xi32>
    %13 = arith.addi %8, %12 : vector<16x8xi32>
    %14 = arith.sitofp %13 : vector<16x8xi32> to vector<16x8xbf16>
    %c0_3 = arith.constant 0 : index
    %c0_4 = arith.constant 0 : index
    %15 = vector.load %arg3[%c0_3, %c0_4] : memref<8x528xbf16, #tpu.memory_space<vmem>>, vector<8x528xbf16>
    %cst = arith.constant dense<0.000000e+00> : vector<16x528xf32>
    %16 = tpu.matmul %14, %15, %cst {dimension_numbers = #tpu.dot_dimension_numbers<[1], [0], [0], [1], [0, 0, 1, 1], [], []>} : vector<16x8xbf16>, vector<8x528xbf16>, vector<16x528xf32> -> vector<16x528xf32>
    %17 = arith.truncf %16 : vector<16x528xf32> to vector<16x528xbf16>
    %c0_5 = arith.constant 0 : index
    %c0_6 = arith.constant 0 : index
    %18 = vector.load %arg4[%c0_5, %c0_6] : memref<1x528xbf16, #tpu.memory_space<vmem>>, vector<1x528xbf16>
    %19 = vector.broadcast %18 : vector<1x528xbf16> to vector<16x528xbf16>
    %20 = arith.cmpf oeq, %17, %19 : vector<16x528xbf16>
    %21 = arith.extui %20 : vector<16x528xi1> to vector<16x528xi32>
    %22 = arith.sitofp %21 : vector<16x528xi32> to vector<16x528xf32>
    %23 = arith.truncf %22 : vector<16x528xf32> to vector<16x528xbf16>
    %c0_7 = arith.constant 0 : index
    %c0_8 = arith.constant 0 : index
    %24 = vector.load %arg5[%c0_7, %c0_8] : memref<528x128xbf16, #tpu.memory_space<vmem>>, vector<528x128xbf16>
    %cst_9 = arith.constant dense<0.000000e+00> : vector<16x128xf32>
    %25 = tpu.matmul %23, %24, %cst_9 {dimension_numbers = #tpu.dot_dimension_numbers<[1], [0], [0], [1], [0, 0, 1, 1], [], []>} : vector<16x528xbf16>, vector<528x128xbf16>, vector<16x128xf32> -> vector<16x128xf32>
    %c0_10 = arith.constant 0 : index
    %c0_11 = arith.constant 0 : index
    %26 = vector.load %arg6[%c0_10, %c0_11] : memref<528x128xbf16, #tpu.memory_space<vmem>>, vector<528x128xbf16>
    %cst_12 = arith.constant dense<0.000000e+00> : vector<16x128xf32>
    %27 = tpu.matmul %23, %26, %cst_12 {dimension_numbers = #tpu.dot_dimension_numbers<[1], [0], [0], [1], [0, 0, 1, 1], [], []>} : vector<16x528xbf16>, vector<528x128xbf16>, vector<16x128xf32> -> vector<16x128xf32>
    %28 = arith.addf %25, %27 : vector<16x128xf32>
    %c0_13 = arith.constant 0 : index
    %c0_14 = arith.constant 0 : index
    %29 = vector.load %arg7[%c0_13, %c0_14] : memref<16x128xf32, #tpu.memory_space<vmem>>, vector<16x128xf32>
    tpu.vector_store %arg7[%c0_13, %c0_14], %28 {strides = array<i32>} : memref<16x128xf32, #tpu.memory_space<vmem>>, vector<16x128xf32>,
    return
  }
  func.func @transform_0(%arg0: i32) -> (i32, i32) {
    %c0_i32 = arith.constant 0 : i32
    %c0_i32_0 = arith.constant 0 : i32
    return %arg0, %c0_i32 : i32, i32
  }
  func.func @transform_1(%arg0: i32) -> (i32, i32) {
    %c0_i32 = arith.constant 0 : i32
    %c0_i32_0 = arith.constant 0 : i32
    return %arg0, %c0_i32 : i32, i32
  }
  func.func @transform_2(%arg0: i32) -> (i32, i32) {
    %c0_i32 = arith.constant 0 : i32
    %c0_i32_0 = arith.constant 0 : i32
    %c0_i32_1 = arith.constant 0 : i32
    return %c0_i32, %c0_i32_0 : i32, i32
  }
  func.func @transform_3(%arg0: i32) -> (i32, i32) {
    %c0_i32 = arith.constant 0 : i32
    %c0_i32_0 = arith.constant 0 : i32
    %c0_i32_1 = arith.constant 0 : i32
    return %c0_i32, %c0_i32_0 : i32, i32
  }
  func.func @transform_4(%arg0: i32) -> (i32, i32) {
    %c0_i32 = arith.constant 0 : i32
    %c0_i32_0 = arith.constant 0 : i32
    %c0_i32_1 = arith.constant 0 : i32
    return %c0_i32, %c0_i32_0 : i32, i32
  }
  func.func @transform_5(%arg0: i32) -> (i32, i32) {
    %c0_i32 = arith.constant 0 : i32
    %c0_i32_0 = arith.constant 0 : i32
    %c0_i32_1 = arith.constant 0 : i32
    return %c0_i32, %c0_i32_0 : i32, i32
  }
  func.func @transform_6(%arg0: i32) -> (i32, i32) {
    %c0_i32 = arith.constant 0 : i32
    %c0_i32_0 = arith.constant 0 : i32
    return %arg0, %c0_i32 : i32, i32
  }
}

</mosaic_0001>

<llo_original>
// kernel: tpu_custom_call.1
$region0: #{tpu_custom_call.1}
  #allocation0 [shape = 'u32[]', space=smem, size = 0x4, offset = 0x4, fixed_abs, tag = 'smem constant byte address 0x4 - core index']
  #allocation1 [shape = 'u32[144,128]{1,0:T(1,128)}', space=vmem, size = 0x12000, scoped, tag = 'internal scratch']
  %s0 = inlined_call_operand.vmem [shape: s32[32,8], index: 0, kind: input, shape index: {}]
  %s1 = inlined_call_operand.vmem [shape: s32[32,8], index: 1, kind: input, shape index: {}]
  %s2 = inlined_call_operand.vmem [shape: bf16[8,528], index: 2, kind: input, shape index: {}]
  %s3 = inlined_call_operand.vmem [shape: bf16[1,528], index: 3, kind: input, shape index: {}]
  %s4 = inlined_call_operand.hbm [shape: bf16[528,128], index: 4, kind: input, shape index: {}]
  %s5 = inlined_call_operand.hbm [shape: bf16[528,128], index: 5, kind: input, shape index: {}]
  %s6 = inlined_call_operand.hbm [shape: f32[32,128], index: 6, kind: output, shape index: {}]
  %s7 = sld [smem:[#allocation0]]
  $region65: #{tpu_custom_call.1} parent=0
    _
  %s9 = ssub.s32 1, %s7
  %s10 = scalar_select 0, %s9, %s7
  $region1: #{tpu_custom_call.1} parent=0
    #allocation2 [shape = 'u8[135168]{0}', space=vmem, size = 0x21000, scoped, tag = 'input window, operand 4, single buffered']
    #allocation3 [shape = 's32[2]{0}', space=sflag, size = 0x8, scoped, tag = 'scoped memory for tpu_custom_call.1']
    #allocation4 [shape = 's32[2]{0}', space=sflag, size = 0x8, scoped, tag = 'scoped memory for tpu_custom_call.1']
    #allocation5 [shape = 'u8[135168]{0}', space=vmem, size = 0x21000, scoped, tag = 'input window, operand 5, single buffered']
    #allocation6 [shape = 's32[1]{0}', space=sflag, size = 0x4, scoped, tag = 'scoped memory for tpu_custom_call.1']
    #allocation7 [shape = 'u8[16384]{0}', space=vmem, size = 0x4000, scoped, tag = 'output window, operand 0']
    %11 = vsyncpa [#allocation3], 0
    %12 = vsyncpa [#allocation6], 0
    %13 = vsyncpa [#allocation4], 0
    %s14 = scalar_lea.sflag [#allocation4], 1
    %15 = vsyncpa %s14, 0
    loop: start=0, step=1, limit=4
    $region2: #{tpu_custom_call.1} parent=1 // loop_pre_header
      _
    $region3: #{tpu_custom_call.1} parent=1 // loop_header
      %s17 = sphi 0, %s21
      %p18 = scmp.ge.s32.totalorder %s17, 4
      %s27 = sphi 0, %s29
      %s30 = sphi 0, %s27
      %s31 = sphi 0, %s30
      %s47 = sphi 0, %s31
      %s53 = sphi 0, %s55
      %s56 = sphi 0, %s53
      %s57 = sphi 0, %s56
      %s73 = sphi 0, %s57
      %s77 = sphi 0, %s77
      %s79 = sphi 0, %s77
      %s80 = sphi 0, %s79
      %s94 = sphi 0, %s80
      %s98 = sphi 0, %s98
      %s100 = sphi 0, %s98
      %s101 = sphi 0, %s100
      %s115 = sphi 0, %s101
      %s119 = sphi 0, %s119
      %s121 = sphi 0, %s119
      %s122 = sphi 0, %s121
      %s136 = sphi 0, %s122
      %s140 = sphi 0, %s140
      %s142 = sphi 0, %s140
      %s143 = sphi 0, %s142
      %s157 = sphi 0, %s143
      %s163 = sphi 0, %s165
      %s166 = sphi 0, %s163
      %s167 = sphi 0, %s166
      %s183 = sphi 0, %s167
    $region4: #{tpu_custom_call.1} parent=1 // loop_header_branch
      %20 = sbr.rel (%p18) target = $region8
    $region5: #{tpu_custom_call.1} parent=1 // loop_body
      %s22 = ssub.s32 %s17, 1
      %s23 = ssub.s32 %s17, 2
      %s24 = sadd.s32 %s17, 1
      %s25 = ssub.s32 %s17, %s24
      %p26 = scmp.eq.s32.totalorder %s25, 0
      %s28 = sadd.s32 %s27, 1
      %s29 = scalar_select %p26, %s27, %s28
      %p32 = pneg %p26
      %p33 = scmp.eq.s32.totalorder %s17, 1
      %p34 = por %p32, %p33
      %p35 = scmp.ne.s32.totalorder %s27, %s30
      %p36 = scmp.eq.s32.totalorder %s17, 0
      %p37 = por %p35, %p36
      %p38 = scmp.ne.s32.totalorder %s27, %s30
      %p39 = scmp.eq.s32.totalorder %s22, 1
      %p40 = por %p38, %p39
      %p41 = scmp.ne.s32.totalorder %s30, %s31
      %p42 = scmp.eq.s32.totalorder %s22, 0
      %p43 = por %p41, %p42
      %p44 = scmp.ne.s32.totalorder %s30, %s31
      %p45 = scmp.eq.s32.totalorder %s23, 1
      %p46 = por %p44, %p45
      %p48 = scmp.ne.s32.totalorder %s31, %s47
      %p49 = scmp.eq.s32.totalorder %s23, 0
      %p50 = por %p48, %p49
      %s51 = ssub.s32 %s17, %s24
      %p52 = scmp.eq.s32.totalorder %s51, 0
      %s54 = sadd.s32 %s53, 1
      %s55 = scalar_select %p52, %s53, %s54
      %p58 = pneg %p52
      %p59 = scmp.eq.s32.totalorder %s17, 1
      %p60 = por %p58, %p59
      %p61 = scmp.ne.s32.totalorder %s53, %s56
      %p62 = scmp.eq.s32.totalorder %s17, 0
      %p63 = por %p61, %p62
      %p64 = scmp.ne.s32.totalorder %s53, %s56
      %p65 = scmp.eq.s32.totalorder %s22, 1
      %p66 = por %p64, %p65
      %p67 = scmp.ne.s32.totalorder %s56, %s57
      %p68 = scmp.eq.s32.totalorder %s22, 0
      %p69 = por %p67, %p68
      %p70 = scmp.ne.s32.totalorder %s56, %s57
      %p71 = scmp.eq.s32.totalorder %s23, 1
      %p72 = por %p70, %p71
      %p74 = scmp.ne.s32.totalorder %s57, %s73
      %p75 = scmp.eq.s32.totalorder %s23, 0
      %p76 = por %p74, %p75
      %s78 = sadd.s32 %s77, 1
      %p81 = scmp.eq.s32.totalorder %s17, 1
      %p82 = scmp.ne.s32.totalorder %s77, %s79
      %p83 = scmp.eq.s32.totalorder %s17, 0
      %p84 = por %p82, %p83
      %p85 = scmp.ne.s32.totalorder %s77, %s79
      %p86 = scmp.eq.s32.totalorder %s22, 1
      %p87 = por %p85, %p86
      %p88 = scmp.ne.s32.totalorder %s79, %s80
      %p89 = scmp.eq.s32.totalorder %s22, 0
      %p90 = por %p88, %p89
      %p91 = scmp.ne.s32.totalorder %s79, %s80
      %p92 = scmp.eq.s32.totalorder %s23, 1
      %p93 = por %p91, %p92
      %p95 = scmp.ne.s32.totalorder %s80, %s94
      %p96 = scmp.eq.s32.totalorder %s23, 0
      %p97 = por %p95, %p96
      %s99 = sadd.s32 %s98, 1
      %p102 = scmp.eq.s32.totalorder %s17, 1
      %p103 = scmp.ne.s32.totalorder %s98, %s100
      %p104 = scmp.eq.s32.totalorder %s17, 0
      %p105 = por %p103, %p104
      %p106 = scmp.ne.s32.totalorder %s98, %s100
      %p107 = scmp.eq.s32.totalorder %s22, 1
      %p108 = por %p106, %p107
      %p109 = scmp.ne.s32.totalorder %s100, %s101
      %p110 = scmp.eq.s32.totalorder %s22, 0
      %p111 = por %p109, %p110
      %p112 = scmp.ne.s32.totalorder %s100, %s101
      %p113 = scmp.eq.s32.totalorder %s23, 1
      %p114 = por %p112, %p113
      %p116 = scmp.ne.s32.totalorder %s101, %s115
      %p117 = scmp.eq.s32.totalorder %s23, 0
      %p118 = por %p116, %p117
      %s120 = sadd.s32 %s119, 1
      %p123 = scmp.eq.s32.totalorder %s17, 1
      %p124 = scmp.ne.s32.totalorder %s119, %s121
      %p125 = scmp.eq.s32.totalorder %s17, 0
      %p126 = por %p124, %p125
      %p127 = scmp.ne.s32.totalorder %s119, %s121
      %p128 = scmp.eq.s32.totalorder %s22, 1
      %p129 = por %p127, %p128
      %p130 = scmp.ne.s32.totalorder %s121, %s122
      %p131 = scmp.eq.s32.totalorder %s22, 0
      %p132 = por %p130, %p131
      %p133 = scmp.ne.s32.totalorder %s121, %s122
      %p134 = scmp.eq.s32.totalorder %s23, 1
      %p135 = por %p133, %p134
      %p137 = scmp.ne.s32.totalorder %s122, %s136
      %p138 = scmp.eq.s32.totalorder %s23, 0
      %p139 = por %p137, %p138
      %s141 = sadd.s32 %s140, 1
      %p144 = scmp.eq.s32.totalorder %s17, 1
      %p145 = scmp.ne.s32.totalorder %s140, %s142
      %p146 = scmp.eq.s32.totalorder %s17, 0
      %p147 = por %p145, %p146
      %p148 = scmp.ne.s32.totalorder %s140, %s142
      %p149 = scmp.eq.s32.totalorder %s22, 1
      %p150 = por %p148, %p149
      %p151 = scmp.ne.s32.totalorder %s142, %s143
      %p152 = scmp.eq.s32.totalorder %s22, 0
      %p153 = por %p151, %p152
      %p154 = scmp.ne.s32.totalorder %s142, %s143
      %p155 = scmp.eq.s32.totalorder %s23, 1
      %p156 = por %p154, %p155
      %p158 = scmp.ne.s32.totalorder %s143, %s157
      %p159 = scmp.eq.s32.totalorder %s23, 0
      %p160 = por %p158, %p159
      %s161 = ssub.s32 %s17, %s24
      %p162 = scmp.eq.s32.totalorder %s161, 0
      %s164 = sadd.s32 %s163, 1
      %s165 = scalar_select %p162, %s163, %s164
      %p168 = pneg %p162
      %p169 = scmp.eq.s32.totalorder %s17, 1
      %p170 = por %p168, %p169
      %p171 = scmp.ne.s32.totalorder %s163, %s166
      %p172 = scmp.eq.s32.totalorder %s17, 0
      %p173 = por %p171, %p172
      %p174 = scmp.ne.s32.totalorder %s163, %s166
      %p175 = scmp.eq.s32.totalorder %s22, 1
      %p176 = por %p174, %p175
      %p177 = scmp.ne.s32.totalorder %s166, %s167
      %p178 = scmp.eq.s32.totalorder %s22, 0
      %p179 = por %p177, %p178
      %p180 = scmp.ne.s32.totalorder %s166, %s167
      %p181 = scmp.eq.s32.totalorder %s23, 1
      %p182 = por %p180, %p181
      %p184 = scmp.ne.s32.totalorder %s167, %s183
      %p185 = scmp.eq.s32.totalorder %s23, 0
      %p186 = por %p184, %p185
      %p187 = scmp.le.s32.totalorder 1, %s17
      %p188 = scmp.lt.s32.totalorder %s17, 3
      %p189 = pnand %p187, %p188
      %p190 = pneg %p189
      // Predicated region
      $region9: #{tpu_custom_call.1} parent=5 // pred_check
        _
      $region10: #{tpu_custom_call.1} parent=5 // pred_check_branch
        %192 = sbr.rel (%p189) target = $region12
      $region11: #{tpu_custom_call.1} parent=5 // pred_region
        %s193 = ssub.s32 %s17, 1
        // Predicated region
        $region13: #{tpu_custom_call.1} parent=11 // pred_check
          %p194 = pneg %p90
        $region14: #{tpu_custom_call.1} parent=11 // pred_check_branch
          %196 = sbr.rel (%p194) target = $region16
        $region15: #{tpu_custom_call.1} parent=11 // pred_region
          _
        $region16: #{tpu_custom_call.1} parent=11 // pred_fallthru
          _
        // Predicated region
        $region17: #{tpu_custom_call.1} parent=11 // pred_check
          %p197 = pneg %p111
        $region18: #{tpu_custom_call.1} parent=11 // pred_check_branch
          %199 = sbr.rel (%p197) target = $region20
        $region19: #{tpu_custom_call.1} parent=11 // pred_region
          _
        $region20: #{tpu_custom_call.1} parent=11 // pred_fallthru
          _
        // Predicated region
        $region21: #{tpu_custom_call.1} parent=11 // pred_check
          %p200 = pneg %p132
        $region22: #{tpu_custom_call.1} parent=11 // pred_check_branch
          %202 = sbr.rel (%p200) target = $region24
        $region23: #{tpu_custom_call.1} parent=11 // pred_region
          %s204 = ssub.s32 4224, 4224
          %205 = vsyncadd [#allocation3], %s204
          %s206 = sshll.u32 [#allocation2], 4
          %s207 = int_to_ptr.vmem [resolvable:$true] %s206
          %212 = dma.hbm_to_vmem [thread:$0]  %s4, 4224, %s207, [#allocation3], 64, 64, 4
        $region24: #{tpu_custom_call.1} parent=11 // pred_fallthru
          _
        // Predicated region
        $region25: #{tpu_custom_call.1} parent=11 // pred_check
          %p213 = pneg %p153
        $region26: #{tpu_custom_call.1} parent=11 // pred_check_branch
          %215 = sbr.rel (%p213) target = $region28
        $region27: #{tpu_custom_call.1} parent=11 // pred_region
          %s217 = ssub.s32 4224, 4224
          %218 = vsyncadd [#allocation6], %s217
          %s219 = sshll.u32 [#allocation5], 4
          %s220 = int_to_ptr.vmem [resolvable:$true] %s219
          %225 = dma.hbm_to_vmem [thread:$0]  %s5, 4224, %s220, [#allocation6], 64, 64, 4
        $region28: #{tpu_custom_call.1} parent=11 // pred_fallthru
          _
      $region12: #{tpu_custom_call.1} parent=5 // pred_fallthru
        _
      %p226 = scmp.lt.s32.totalorder %s17, 2
      // Predicated region
      $region29: #{tpu_custom_call.1} parent=5 // pred_check
        %p227 = pneg %p226
      $region30: #{tpu_custom_call.1} parent=5 // pred_check_branch
        %229 = sbr.rel (%p227) target = $region32
      $region31: #{tpu_custom_call.1} parent=5 // pred_region
        // Predicated region
        $region33: #{tpu_custom_call.1} parent=31 // pred_check
          %p230 = pneg %p37
        $region34: #{tpu_custom_call.1} parent=31 // pred_check_branch
          %232 = sbr.rel (%p230) target = $region36
        $region35: #{tpu_custom_call.1} parent=31 // pred_region
          %s233 = smul.u32 2, %s17
          %p234 = scmp.lt.s32.totalorder %s233, 3
          %s235 = scalar_select %p234, %s233, 3
          %s236 = smul.addr %s235, 8
          %s237 = scalar_lea.vmem %s0, %s236
          %s238 = smul.u32 2, %s17
        $region36: #{tpu_custom_call.1} parent=31 // pred_fallthru
          _
        // Predicated region
        $region37: #{tpu_custom_call.1} parent=31 // pred_check
          %p239 = pneg %p63
        $region38: #{tpu_custom_call.1} parent=31 // pred_check_branch
          %241 = sbr.rel (%p239) target = $region40
        $region39: #{tpu_custom_call.1} parent=31 // pred_region
          %s242 = smul.u32 2, %s17
          %p243 = scmp.lt.s32.totalorder %s242, 3
          %s244 = scalar_select %p243, %s242, 3
          %s245 = smul.addr %s244, 8
          %s246 = scalar_lea.vmem %s1, %s245
          %s247 = smul.u32 2, %s17
        $region40: #{tpu_custom_call.1} parent=31 // pred_fallthru
          _
      $region32: #{tpu_custom_call.1} parent=5 // pred_fallthru
        _
      %p248 = scmp.le.s32.totalorder 1, %s17
      %p249 = scmp.lt.s32.totalorder %s17, 3
      %p250 = pnand %p248, %p249
      %p251 = pneg %p250
      // Predicated region
      $region41: #{tpu_custom_call.1} parent=5 // pred_check
        _
      $region42: #{tpu_custom_call.1} parent=5 // pred_check_branch
        %253 = sbr.rel (%p250) target = $region44
      $region43: #{tpu_custom_call.1} parent=5 // pred_region
        %s254 = ssub.s32 %s17, 1
        // Predicated region
        $region45: #{tpu_custom_call.1} parent=43 // pred_check
          %p255 = pneg %p132
        $region46: #{tpu_custom_call.1} parent=43 // pred_check_branch
          %257 = sbr.rel (%p255) target = $region48
        $region47: #{tpu_custom_call.1} parent=43 // pred_region
          %258 = dma.done [#allocation3], 4224
        $region48: #{tpu_custom_call.1} parent=43 // pred_fallthru
          _
        // Predicated region
        $region49: #{tpu_custom_call.1} parent=43 // pred_check
          %p259 = pneg %p153
        $region50: #{tpu_custom_call.1} parent=43 // pred_check_branch
          %261 = sbr.rel (%p259) target = $region52
        $region51: #{tpu_custom_call.1} parent=43 // pred_region
          %262 = dma.done [#allocation6], 4224
        $region52: #{tpu_custom_call.1} parent=43 // pred_fallthru
          _
        %s263 = smul.u32 2, %s22
        %p264 = scmp.lt.s32.totalorder %s263, 3
        %s265 = scalar_select %p264, %s263, 3
        %s266 = smul.addr %s265, 8
        %s267 = scalar_lea.vmem %s0, %s266
        %p268 = pneg %p43
        %p269 = pneg %p40
        %s270 = smul.u32 2, %s22
        %p271 = scmp.lt.s32.totalorder %s270, 3
        %s272 = scalar_select %p271, %s270, 3
        %s273 = smul.addr %s272, 8
        %s274 = scalar_lea.vmem %s1, %s273
        %p275 = pneg %p69
        %p276 = pneg %p66
        %p277 = pneg %p90
        %p278 = pneg %p87
        %p279 = pneg %p111
        %p280 = pneg %p108
        %p281 = pneg %p132
        %p282 = pneg %p129
        %p283 = pneg %p153
        %p284 = pneg %p150
        %p285 = pneg %p179
        %p286 = pneg %p176
        %s287 = sand.u32 %s166, 1
        %s288 = scalar_lea.sflag [#allocation4], %s287
        %s289 = sand.u32 %s166, 1
        %s290 = smul.addr %s289, 16
        %s291 = scalar_lea.vmem [#allocation7], %s290
        %s292 = smul.u32 2, %s22
        %p293 = scmp.lt.s32.totalorder %s292, 3
        %s294 = scalar_select %p293, %s292, 3
        %s295 = smul.addr %s294, 8
        %s296 = scalar_lea.vmem %s0, %s295
        %s297 = smul.u32 2, %s22
        %s298 = smul.u32 2, %s22
        %p299 = scmp.lt.s32.totalorder %s298, 3
        %s300 = scalar_select %p299, %s298, 3
        %s301 = smul.addr %s300, 8
        %s302 = scalar_lea.vmem %s1, %s301
        %s303 = smul.u32 2, %s22
        %s304 = smul.u32 2, %s22
        %v308 = vld [vmem:[%s296] sm:$0xff]
        %v309 = vld [vmem:[%s296 + $0x8] sm:$0xff]
        %v310 = vld [vmem:[%s302] sm:$0xff]
        %v311 = vld [vmem:[%s302 + $0x8] sm:$0xff]
        %v312 = vadd.s32 %v308, 32
        %v313 = vadd.s32 %v309, 32
        %vm314 = vcmp.gt.s32.totalorder %v312, 0
        %v315 = vsel %vm314, %v312, 0
        %vm316 = vcmp.gt.s32.totalorder %v313, 0
        %v317 = vsel %vm316, %v313, 0
        %vm318 = vcmp.lt.s32.totalorder %v315, 64
        %v319 = vsel %vm318, %v315, 64
        %vm320 = vcmp.lt.s32.totalorder %v317, 64
        %v321 = vsel %vm320, %v317, 64
        %v322 = vmul.u32 %v319, %v310
        %v323 = vmul.u32 %v321, %v311
        %v324 = vsub.s32 1, %v310
        %v325 = vsub.s32 1, %v311
        %v326 = vmul.u32 %v324, 65
        %v327 = vmul.u32 %v325, 65
        %v328 = vadd.s32 %v322, %v326
        %v329 = vadd.s32 %v323, %v327
        %v330 = vcvt.s32.f32 %v328
        %v331 = vcvt.s32.f32 %v329
        %v332 = vpack.c.bf16 %v331, %v330
        %v333 = vld [vmem:[%s2] sm:$0xff]
        %v334 = vld [vmem:[%s2 + $0x8] sm:$0xff]
        %v335 = vld [vmem:[%s2 + $0x10] sm:$0xf]
        %v339 = vunpack.c.l.b16 %v333
        %v340 = vunpack.c.h.b16 %v333
        %v341 = vunpack.c.l.b16 %v334
        %v342 = vunpack.c.h.b16 %v334
        %v343 = vunpack.c.l.b16 %v335
        %v344 = vpack.c.b16 %v339, %v339
        %v345 = vpack.c.b16 %v340, %v340
        %v346 = vpack.c.b16 %v341, %v341
        %v347 = vpack.c.b16 %v342, %v342
        %v348 = vpack.c.b16 %v343, %v343
        %vm349 = vcmask 64512
        %v351 = vsel %vm349, %v332, 0
        %vm353 = vcmask 1043456
        %v355 = vsel %vm353, %v344, 0
        %v358 = vsel %vm353, %v345, 0
        %v361 = vsel %vm353, %v346, 0
        %v364 = vsel %vm353, %v347, 0
        %v367 = vsel %vm353, %v348, 0
        %369 = vmatprep.subr.bf16.mxu0 %v358
        %370 = vmatpush1.bf16.msra.mxu0 %v355
        %371 = vmatprep.subr.bf16.mxu0 0
        %372 = vmatpush1.bf16.msra.mxu0 0
        %373 = vmatprep.subr.bf16.mxu0 0
        %374 = vmatpush1.bf16.msra.mxu0 0
        %375 = vmatprep.subr.bf16.mxu0 0
        %376 = vmatpush1.bf16.msra.mxu0 0
        %377 = vmatprep.subr.bf16.mxu0 0
        %378 = vmatpush1.bf16.msra.mxu0 0
        %379 = vmatprep.subr.bf16.mxu0 0
        %380 = vmatpush1.bf16.msra.mxu0 0
        %381 = vmatprep.subr.bf16.mxu0 0
        %382 = vmatpush1.bf16.msra.mxu0 0
        %383 = vmatprep.subr.bf16.mxu0 0
        %384 = vmatpush1.bf16.msra.mxu0 0
        %385 = vmatprep.subr.bf16.mxu0 0
        %386 = vmatpush1.bf16.msra.mxu0 0
        %387 = vmatprep.subr.bf16.mxu0 0
        %388 = vmatpush1.bf16.msra.mxu0 0
        %389 = vmatprep.subr.bf16.mxu0 0
        %390 = vmatpush1.bf16.msra.mxu0 0
        %391 = vmatprep.subr.bf16.mxu0 0
        %392 = vmatpush1.bf16.msra.mxu0 0
        %393 = vmatprep.subr.bf16.mxu0 0
        %394 = vmatpush1.bf16.msra.mxu0 0
        %395 = vmatprep.subr.bf16.mxu0 0
        %396 = vmatpush1.bf16.msra.mxu0 0
        %397 = vmatprep.subr.bf16.mxu0 0
        %398 = vmatpush1.bf16.msra.mxu0 0
        %399 = vmatprep.subr.bf16.mxu0 0
        %400 = vmatpush1.bf16.msra.mxu0 0
        %401 = vmatprep.mubr.bf16.mxu0 0
        %402 = vmatmul.mubr.bf16.gmra.mrb[0].mxu0 %v351
        %v403 = vpop.f32.mrb[0].mxu0
        %v404 = vadd.f32 0.0, %v403
        %v405 = vpop.f32.mrb[0].mxu0
        %v406 = vadd.f32 0.0, %v405
        %v407 = vpop.f32.mrb[0].mxu0
        %v408 = vadd.f32 0.0, %v407
        %v409 = vpop.f32.mrb[0].mxu0
        %v410 = vadd.f32 0.0, %v409
        %411 = vdwg.mxu0
        %412 = vmatprep.subr.bf16.mxu0 %v364
        %413 = vmatpush1.bf16.msra.mxu0 %v361
        %414 = vmatprep.subr.bf16.mxu0 0
        %415 = vmatpush1.bf16.msra.mxu0 0
        %416 = vmatprep.subr.bf16.mxu0 0
        %417 = vmatpush1.bf16.msra.mxu0 0
        %418 = vmatprep.subr.bf16.mxu0 0
        %419 = vmatpush1.bf16.msra.mxu0 0
        %420 = vmatprep.subr.bf16.mxu0 0
        %421 = vmatpush1.bf16.msra.mxu0 0
        %422 = vmatprep.subr.bf16.mxu0 0
        %423 = vmatpush1.bf16.msra.mxu0 0
        %424 = vmatprep.subr.bf16.mxu0 0
        %425 = vmatpush1.bf16.msra.mxu0 0
        %426 = vmatprep.subr.bf16.mxu0 0
        %427 = vmatpush1.bf16.msra.mxu0 0
        %428 = vmatprep.subr.bf16.mxu0 0
        %429 = vmatpush1.bf16.msra.mxu0 0
        %430 = vmatprep.subr.bf16.mxu0 0
        %431 = vmatpush1.bf16.msra.mxu0 0
        %432 = vmatprep.subr.bf16.mxu0 0
        %433 = vmatpush1.bf16.msra.mxu0 0
        %434 = vmatprep.subr.bf16.mxu0 0
        %435 = vmatpush1.bf16.msra.mxu0 0
        %436 = vmatprep.subr.bf16.mxu0 0
        %437 = vmatpush1.bf16.msra.mxu0 0
        %438 = vmatprep.subr.bf16.mxu0 0
        %439 = vmatpush1.bf16.msra.mxu0 0
        %440 = vmatprep.subr.bf16.mxu0 0
        %441 = vmatpush1.bf16.msra.mxu0 0
        %442 = vmatprep.subr.bf16.mxu0 0
        %443 = vmatpush1.bf16.msra.mxu0 0
        %444 = vmatprep.mubr.bf16.mxu0 0
        %445 = vmatmul.mubr.bf16.gmra.mrb[0].mxu0 %v351
        %v446 = vpop.f32.mrb[0].mxu0
        %v447 = vadd.f32 0.0, %v446
        %v448 = vpop.f32.mrb[0].mxu0
        %v449 = vadd.f32 0.0, %v448
        %v450 = vpop.f32.mrb[0].mxu0
        %v451 = vadd.f32 0.0, %v450
        %v452 = vpop.f32.mrb[0].mxu0
        %v453 = vadd.f32 0.0, %v452
        %454 = vdwg.mxu0
        %455 = vmatprep.subr.bf16.mxu0 0
        %456 = vmatpush1.bf16.msra.mxu0 %v367
        %457 = vmatprep.subr.bf16.mxu0 0
        %458 = vmatpush1.bf16.msra.mxu0 0
        %459 = vmatprep.subr.bf16.mxu0 0
        %460 = vmatpush1.bf16.msra.mxu0 0
        %461 = vmatprep.subr.bf16.mxu0 0
        %462 = vmatpush1.bf16.msra.mxu0 0
        %463 = vmatprep.subr.bf16.mxu0 0
        %464 = vmatpush1.bf16.msra.mxu0 0
        %465 = vmatprep.subr.bf16.mxu0 0
        %466 = vmatpush1.bf16.msra.mxu0 0
        %467 = vmatprep.subr.bf16.mxu0 0
        %468 = vmatpush1.bf16.msra.mxu0 0
        %469 = vmatprep.subr.bf16.mxu0 0
        %470 = vmatpush1.bf16.msra.mxu0 0
        %471 = vmatprep.subr.bf16.mxu0 0
        %472 = vmatpush1.bf16.msra.mxu0 0
        %473 = vmatprep.subr.bf16.mxu0 0
        %474 = vmatpush1.bf16.msra.mxu0 0
        %475 = vmatprep.subr.bf16.mxu0 0
        %476 = vmatpush1.bf16.msra.mxu0 0
        %477 = vmatprep.subr.bf16.mxu0 0
        %478 = vmatpush1.bf16.msra.mxu0 0
        %479 = vmatprep.subr.bf16.mxu0 0
        %480 = vmatpush1.bf16.msra.mxu0 0
        %481 = vmatprep.subr.bf16.mxu0 0
        %482 = vmatpush1.bf16.msra.mxu0 0
        %483 = vmatprep.subr.bf16.mxu0 0
        %484 = vmatpush1.bf16.msra.mxu0 0
        %485 = vmatprep.subr.bf16.mxu0 0
        %486 = vmatpush1.bf16.msra.mxu0 0
        %487 = vmatprep.mubr.bf16.mxu0 0
        %488 = vmatmul.mubr.bf16.gmra.mrb[0].mxu0 %v351
        %v489 = vpop.f32.mrb[0].mxu0
        %v490 = vadd.f32 0.0, %v489
        %v491 = vpop.f32.mrb[0].mxu0
        %v492 = vpop.f32.mrb[0].mxu0
        %v493 = vadd.f32 0.0, %v492
        %v494 = vpop.f32.mrb[0].mxu0
        %495 = vdwg.mxu0
        %v496 = vpack.c.bf16 %v408, %v404
        %v497 = vpack.c.bf16 %v410, %v406
        %v498 = vpack.c.bf16 %v451, %v447
        %v499 = vpack.c.bf16 %v453, %v449
        %v500 = vpack.c.bf16 %v493, %v490
        %v501 = vld [vmem:[%s3] sm:$0x1f]
        %v503 = vcombine.high %v501, %v501
        %v505 = vunpack.c.l.s4 1966171168
        %v506 = vunpack.c.0.s8 %v505
        %v507 = vlaneseq
        %v508 = vshrl.u32 %v507, 7
        %v509 = vsub.s32 %v506, %v508
        %v510 = vrot.slane %v501, %v509
        %v512 = vunpack.c.l.s4 1966171168
        %v513 = vunpack.c.0.s8 %v512
        %v514 = vlaneseq
        %v515 = vshrl.u32 %v514, 7
        %v516 = vsub.s32 %v513, %v515
        %v517 = vrot.slane %v503, %v516
        %v518 = vcombine.high %v510, %v510
        %v520 = vunpack.c.l.s4 1966171168
        %v521 = vunpack.c.0.s8 %v520
        %v522 = vlaneseq
        %v523 = vshrl.u32 %v522, 7
        %v524 = vsub.s32 %v521, %v523
        %v525 = vrot.slane %v510, %v524
        %v527 = vunpack.c.l.s4 1966171168
        %v528 = vunpack.c.0.s8 %v527
        %v529 = vlaneseq
        %v530 = vshrl.u32 %v529, 7
        %v531 = vsub.s32 %v528, %v530
        %v532 = vrot.slane %v517, %v531
        %v534 = vunpack.c.l.s4 1966171168
        %v535 = vunpack.c.0.s8 %v534
        %v536 = vlaneseq
        %v537 = vshrl.u32 %v536, 7
        %v538 = vsub.s32 %v535, %v537
        %v539 = vrot.slane %v518, %v538
        %v540 = vcombine.high %v525, %v525
        %v541 = vcombine.high %v539, %v539
        %v543 = vpack.i.b16 %v525, %v525
        %v545 = vlaneseq
        %v546 = vshrl.u32 %v545, 7
        %v547 = vsub.s32 0, %v546
        %v548 = vrot.slane %v543, %v547
        %v550 = vpack.i.b16 %v539, %v539
        %v552 = vlaneseq
        %v553 = vshrl.u32 %v552, 7
        %v554 = vsub.s32 0, %v553
        %v555 = vrot.slane %v550, %v554
        %v557 = vpack.i.b16 %v540, %v540
        %v559 = vlaneseq
        %v560 = vshrl.u32 %v559, 7
        %v561 = vsub.s32 0, %v560
        %v562 = vrot.slane %v557, %v561
        %v564 = vpack.i.b16 %v541, %v541
        %v566 = vlaneseq
        %v567 = vshrl.u32 %v566, 7
        %v568 = vsub.s32 0, %v567
        %v569 = vrot.slane %v564, %v568
        %v571 = vpack.i.b16 %v532, %v532
        %v573 = vlaneseq
        %v574 = vshrl.u32 %v573, 7
        %v575 = vsub.s32 0, %v574
        %v576 = vrot.slane %v571, %v575
        %vm577 = vcmp.eq.bf16.partialorder %v496, %v548
        %vm578 = vcmp.eq.bf16.partialorder %v497, %v555
        %vm579 = vcmp.eq.bf16.partialorder %v498, %v562
        %vm580 = vcmp.eq.bf16.partialorder %v499, %v569
        %vm581 = vcmp.eq.bf16.partialorder %v500, %v576
        %v582 = vsel %vm577, 65537, 0
        %v583 = vsel %vm578, 65537, 0
        %v584 = vsel %vm579, 65537, 0
        %v585 = vsel %vm580, 65537, 0
        %v586 = vsel %vm581, 65537, 0
        %v587 = vunpack.c.l.b16 %v582
        %v588 = vunpack.c.l.b16 %v583
        %v589 = vunpack.c.l.b16 %v584
        %v590 = vunpack.c.l.b16 %v585
        %v591 = vunpack.c.l.b16 %v586
        %v592 = vunpack.c.h.b16 %v582
        %v593 = vunpack.c.h.b16 %v583
        %v594 = vunpack.c.h.b16 %v584
        %v595 = vunpack.c.h.b16 %v585
        %v596 = vunpack.c.h.b16 %v586
        %v597 = vpack.c.b16 %v588, %v587
        %v598 = vpack.c.b16 %v590, %v589
        %v599 = vpack.c.b16 %v591, %v591
        %v600 = vpack.c.b16 %v593, %v592
        %v601 = vpack.c.b16 %v595, %v594
        %v602 = vpack.c.b16 %v596, %v596
        %vm603 = vcmp.ne.s16.totalorder %v597, 0
        %vm604 = vcmp.ne.s16.totalorder %v598, 0
        %vm605 = vcmp.ne.s16.totalorder %v599, 0
        %vm606 = vcmp.ne.s16.totalorder %v600, 0
        %vm607 = vcmp.ne.s16.totalorder %v601, 0
        %vm608 = vcmp.ne.s16.totalorder %v602, 0
        %v609 = vsel %vm603, 65537, 0
        %v610 = vsel %vm604, 65537, 0
        %v611 = vsel %vm605, 65537, 0
        %v612 = vsel %vm606, 65537, 0
        %v613 = vsel %vm607, 65537, 0
        %v614 = vsel %vm608, 65537, 0
        %v615 = vunpack.c.l.b16 %v609
        %v616 = vunpack.c.h.b16 %v609
        %v617 = vunpack.c.l.b16 %v610
        %v618 = vunpack.c.h.b16 %v610
        %v619 = vunpack.c.l.b16 %v611
        %v620 = vunpack.c.l.b16 %v612
        %v621 = vunpack.c.h.b16 %v612
        %v622 = vunpack.c.l.b16 %v613
        %v623 = vunpack.c.h.b16 %v613
        %v624 = vunpack.c.l.b16 %v614
        %vm625 = vcmp.ne.s32.totalorder %v615, 0
        %vm626 = vcmp.ne.s32.totalorder %v616, 0
        %vm627 = vcmp.ne.s32.totalorder %v617, 0
        %vm628 = vcmp.ne.s32.totalorder %v618, 0
        %vm629 = vcmp.ne.s32.totalorder %v619, 0
        %vm630 = vcmp.ne.s32.totalorder %v620, 0
        %vm631 = vcmp.ne.s32.totalorder %v621, 0
        %vm632 = vcmp.ne.s32.totalorder %v622, 0
        %vm633 = vcmp.ne.s32.totalorder %v623, 0
        %vm634 = vcmp.ne.s32.totalorder %v624, 0
        %v635 = vsel %vm625, 1, 0
        %v636 = vsel %vm626, 1, 0
        %v637 = vsel %vm627, 1, 0
        %v638 = vsel %vm628, 1, 0
        %v639 = vsel %vm629, 1, 0
        %v640 = vsel %vm630, 1, 0
        %v641 = vsel %vm631, 1, 0
        %v642 = vsel %vm632, 1, 0
        %v643 = vsel %vm633, 1, 0
        %v644 = vsel %vm634, 1, 0
        %v645 = vcvt.s32.f32 %v635
        %v646 = vcvt.s32.f32 %v636
        %v647 = vcvt.s32.f32 %v637
        %v648 = vcvt.s32.f32 %v638
        %v649 = vcvt.s32.f32 %v639
        %v650 = vcvt.s32.f32 %v640
        %v651 = vcvt.s32.f32 %v641
        %v652 = vcvt.s32.f32 %v642
        %v653 = vcvt.s32.f32 %v643
        %v654 = vcvt.s32.f32 %v644
        %v655 = vpack.c.bf16 %v650, %v645
        %v656 = vpack.c.bf16 %v651, %v646
        %v657 = vpack.c.bf16 %v652, %v647
        %v658 = vpack.c.bf16 %v653, %v648
        %v659 = vpack.c.bf16 %v654, %v649
        %v660 = vld [vmem:[#allocation2] sm:$0xf]
        %v661 = vld [vmem:[#allocation2 + $0x4] sm:$0xf]
        %v662 = vld [vmem:[#allocation2 + $0x8] sm:$0xf]
        %v663 = vld [vmem:[#allocation2 + $0xc] sm:$0xf]
        %v664 = vld [vmem:[#allocation2 + $0x10] sm:$0xf]
        %v665 = vld [vmem:[#allocation2 + $0x14] sm:$0xf]
        %v666 = vld [vmem:[#allocation2 + $0x18] sm:$0xf]
        %v667 = vld [vmem:[#allocation2 + $0x1c] sm:$0xf]
        %v668 = vld [vmem:[#allocation2 + $0x20] sm:$0xf]
        %v669 = vld [vmem:[#allocation2 + $0x24] sm:$0xf]
        %v670 = vld [vmem:[#allocation2 + $0x28] sm:$0xf]
        %v671 = vld [vmem:[#allocation2 + $0x2c] sm:$0xf]
        %v672 = vld [vmem:[#allocation2 + $0x30] sm:$0xf]
        %v673 = vld [vmem:[#allocation2 + $0x34] sm:$0xf]
        %v674 = vld [vmem:[#allocation2 + $0x38] sm:$0xf]
        %v675 = vld [vmem:[#allocation2 + $0x3c] sm:$0xf]
        %v676 = vld [vmem:[#allocation2 + $0x40] sm:$0xf]
        %v677 = vld [vmem:[#allocation2 + $0x44] sm:$0xf]
        %v678 = vld [vmem:[#allocation2 + $0x48] sm:$0xf]
        %v679 = vld [vmem:[#allocation2 + $0x4c] sm:$0xf]
        %v680 = vld [vmem:[#allocation2 + $0x50] sm:$0xf]
        %v681 = vld [vmem:[#allocation2 + $0x54] sm:$0xf]
        %v682 = vld [vmem:[#allocation2 + $0x58] sm:$0xf]
        %v683 = vld [vmem:[#allocation2 + $0x5c] sm:$0xf]
        %v684 = vld [vmem:[#allocation2 + $0x60] sm:$0xf]
        %v685 = vld [vmem:[#allocation2 + $0x64] sm:$0xf]
        %v686 = vld [vmem:[#allocation2 + $0x68] sm:$0xf]
        %v687 = vld [vmem:[#allocation2 + $0x6c] sm:$0xf]
        %v688 = vld [vmem:[#allocation2 + $0x70] sm:$0xf]
        %v689 = vld [vmem:[#allocation2 + $0x74] sm:$0xf]
        %v690 = vld [vmem:[#allocation2 + $0x78] sm:$0xf]
        %v691 = vld [vmem:[#allocation2 + $0x7c] sm:$0xf]
        %v692 = vld [vmem:[#allocation2 + $0x80] sm:$0xf]
        %v693 = vld [vmem:[#allocation2 + $0x84] sm:$0xf]
        %v694 = vld [vmem:[#allocation2 + $0x88] sm:$0xf]
        %v695 = vld [vmem:[#allocation2 + $0x8c] sm:$0xf]
        %v696 = vld [vmem:[#allocation2 + $0x90] sm:$0xf]
        %v697 = vld [vmem:[#allocation2 + $0x94] sm:$0xf]
        %v698 = vld [vmem:[#allocation2 + $0x98] sm:$0xf]
        %v699 = vld [vmem:[#allocation2 + $0x9c] sm:$0xf]
        %v700 = vld [vmem:[#allocation2 + $0xa0] sm:$0xf]
        %v701 = vld [vmem:[#allocation2 + $0xa4] sm:$0xf]
        %v702 = vld [vmem:[#allocation2 + $0xa8] sm:$0xf]
        %v703 = vld [vmem:[#allocation2 + $0xac] sm:$0xf]
        %v704 = vld [vmem:[#allocation2 + $0xb0] sm:$0xf]
        %v705 = vld [vmem:[#allocation2 + $0xb4] sm:$0xf]
        %v706 = vld [vmem:[#allocation2 + $0xb8] sm:$0xf]
        %v707 = vld [vmem:[#allocation2 + $0xbc] sm:$0xf]
        %v708 = vld [vmem:[#allocation2 + $0xc0] sm:$0xf]
        %v709 = vld [vmem:[#allocation2 + $0xc4] sm:$0xf]
        %v710 = vld [vmem:[#allocation2 + $0xc8] sm:$0xf]
        %v711 = vld [vmem:[#allocation2 + $0xcc] sm:$0xf]
        %v712 = vld [vmem:[#allocation2 + $0xd0] sm:$0xf]
        %v713 = vld [vmem:[#allocation2 + $0xd4] sm:$0xf]
        %v714 = vld [vmem:[#allocation2 + $0xd8] sm:$0xf]
        %v715 = vld [vmem:[#allocation2 + $0xdc] sm:$0xf]
        %v716 = vld [vmem:[#allocation2 + $0xe0] sm:$0xf]
        %v717 = vld [vmem:[#allocation2 + $0xe4] sm:$0xf]
        %v718 = vld [vmem:[#allocation2 + $0xe8] sm:$0xf]
        %v719 = vld [vmem:[#allocation2 + $0xec] sm:$0xf]
        %v720 = vld [vmem:[#allocation2 + $0xf0] sm:$0xf]
        %v721 = vld [vmem:[#allocation2 + $0xf4] sm:$0xf]
        %v722 = vld [vmem:[#allocation2 + $0xf8] sm:$0xf]
        %v723 = vld [vmem:[#allocation2 + $0xfc] sm:$0xf]
        %v724 = vld [vmem:[#allocation2 + $0x100] sm:$0xf]
        %v725 = vld [vmem:[#allocation2 + $0x104] sm:$0xf]
        %v726 = vld [vmem:[#allocation5] sm:$0xf]
        %v727 = vld [vmem:[#allocation5 + $0x4] sm:$0xf]
        %v728 = vld [vmem:[#allocation5 + $0x8] sm:$0xf]
        %v729 = vld [vmem:[#allocation5 + $0xc] sm:$0xf]
        %v730 = vld [vmem:[#allocation5 + $0x10] sm:$0xf]
        %v731 = vld [vmem:[#allocation5 + $0x14] sm:$0xf]
        %v732 = vld [vmem:[#allocation5 + $0x18] sm:$0xf]
        %v733 = vld [vmem:[#allocation5 + $0x1c] sm:$0xf]
        %v734 = vld [vmem:[#allocation5 + $0x20] sm:$0xf]
        %v735 = vld [vmem:[#allocation5 + $0x24] sm:$0xf]
        %v736 = vld [vmem:[#allocation5 + $0x28] sm:$0xf]
        %v737 = vld [vmem:[#allocation5 + $0x2c] sm:$0xf]
        %v738 = vld [vmem:[#allocation5 + $0x30] sm:$0xf]
        %v739 = vld [vmem:[#allocation5 + $0x34] sm:$0xf]
        %v740 = vld [vmem:[#allocation5 + $0x38] sm:$0xf]
        %v741 = vld [vmem:[#allocation5 + $0x3c] sm:$0xf]
        %v742 = vld [vmem:[#allocation5 + $0x40] sm:$0xf]
        %v743 = vld [vmem:[#allocation5 + $0x44] sm:$0xf]
        %v744 = vld [vmem:[#allocation5 + $0x48] sm:$0xf]
        %v745 = vld [vmem:[#allocation5 + $0x4c] sm:$0xf]
        %v746 = vld [vmem:[#allocation5 + $0x50] sm:$0xf]
        %v747 = vld [vmem:[#allocation5 + $0x54] sm:$0xf]
        %v748 = vld [vmem:[#allocation5 + $0x58] sm:$0xf]
        %v749 = vld [vmem:[#allocation5 + $0x5c] sm:$0xf]
        %v750 = vld [vmem:[#allocation5 + $0x60] sm:$0xf]
        %v751 = vld [vmem:[#allocation5 + $0x64] sm:$0xf]
        %v752 = vld [vmem:[#allocation5 + $0x68] sm:$0xf]
        %v753 = vld [vmem:[#allocation5 + $0x6c] sm:$0xf]
        %v754 = vld [vmem:[#allocation5 + $0x70] sm:$0xf]
        %v755 = vld [vmem:[#allocation5 + $0x74] sm:$0xf]
        %v756 = vld [vmem:[#allocation5 + $0x78] sm:$0xf]
        %v757 = vld [vmem:[#allocation5 + $0x7c] sm:$0xf]
        %v758 = vld [vmem:[#allocation5 + $0x80] sm:$0xf]
        %v759 = vld [vmem:[#allocation5 + $0x84] sm:$0xf]
        %v760 = vld [vmem:[#allocation5 + $0x88] sm:$0xf]
        %v761 = vld [vmem:[#allocation5 + $0x8c] sm:$0xf]
        %v762 = vld [vmem:[#allocation5 + $0x90] sm:$0xf]
        %v763 = vld [vmem:[#allocation5 + $0x94] sm:$0xf]
        %v764 = vld [vmem:[#allocation5 + $0x98] sm:$0xf]
        %v765 = vld [vmem:[#allocation5 + $0x9c] sm:$0xf]
        %v766 = vld [vmem:[#allocation5 + $0xa0] sm:$0xf]
        %v767 = vld [vmem:[#allocation5 + $0xa4] sm:$0xf]
        %v768 = vld [vmem:[#allocation5 + $0xa8] sm:$0xf]
        %v769 = vld [vmem:[#allocation5 + $0xac] sm:$0xf]
        %v770 = vld [vmem:[#allocation5 + $0xb0] sm:$0xf]
        %v771 = vld [vmem:[#allocation5 + $0xb4] sm:$0xf]
        %v772 = vld [vmem:[#allocation5 + $0xb8] sm:$0xf]
        %v773 = vld [vmem:[#allocation5 + $0xbc] sm:$0xf]
        %v774 = vld [vmem:[#allocation5 + $0xc0] sm:$0xf]
        %v775 = vld [vmem:[#allocation5 + $0xc4] sm:$0xf]
        %v776 = vld [vmem:[#allocation5 + $0xc8] sm:$0xf]
        %v777 = vld [vmem:[#allocation5 + $0xcc] sm:$0xf]
        %v778 = vld [vmem:[#allocation5 + $0xd0] sm:$0xf]
        %v779 = vld [vmem:[#allocation5 + $0xd4] sm:$0xf]
        %v780 = vld [vmem:[#allocation5 + $0xd8] sm:$0xf]
        %v781 = vld [vmem:[#allocation5 + $0xdc] sm:$0xf]
        %v782 = vld [vmem:[#allocation5 + $0xe0] sm:$0xf]
        %v783 = vld [vmem:[#allocation5 + $0xe4] sm:$0xf]
        %v784 = vld [vmem:[#allocation5 + $0xe8] sm:$0xf]
        %v785 = vld [vmem:[#allocation5 + $0xec] sm:$0xf]
        %v786 = vld [vmem:[#allocation5 + $0xf0] sm:$0xf]
        %v787 = vld [vmem:[#allocation5 + $0xf4] sm:$0xf]
        %v788 = vld [vmem:[#allocation5 + $0xf8] sm:$0xf]
        %v789 = vld [vmem:[#allocation5 + $0xfc] sm:$0xf]
        %v790 = vld [vmem:[#allocation5 + $0x100] sm:$0xf]
        %v791 = vld [vmem:[#allocation5 + $0x104] sm:$0xf]
        %v858 = vunpack.c.l.b16 %v726
        %v859 = vunpack.c.l.b16 %v727
        %v860 = vunpack.c.l.b16 %v728
        %v861 = vunpack.c.l.b16 %v729
        %v862 = vunpack.c.l.b16 %v730
        %v863 = vunpack.c.l.b16 %v731
        %v864 = vunpack.c.l.b16 %v732
        %v865 = vunpack.c.l.b16 %v733
        %v866 = vunpack.c.l.b16 %v734
        %v867 = vunpack.c.l.b16 %v735
        %v868 = vunpack.c.l.b16 %v736
        %v869 = vunpack.c.l.b16 %v737
        %v870 = vunpack.c.l.b16 %v738
        %v871 = vunpack.c.l.b16 %v739
        %v872 = vunpack.c.l.b16 %v740
        %v873 = vunpack.c.l.b16 %v741
        %v874 = vunpack.c.l.b16 %v742
        %v875 = vunpack.c.l.b16 %v743
        %v876 = vunpack.c.l.b16 %v744
        %v877 = vunpack.c.l.b16 %v745
        %v878 = vunpack.c.l.b16 %v746
        %v879 = vunpack.c.l.b16 %v747
        %v880 = vunpack.c.l.b16 %v748
        %v881 = vunpack.c.l.b16 %v749
        %v882 = vunpack.c.l.b16 %v750
        %v883 = vunpack.c.l.b16 %v751
        %v884 = vunpack.c.l.b16 %v752
        %v885 = vunpack.c.l.b16 %v753
        %v886 = vunpack.c.l.b16 %v754
        %v887 = vunpack.c.l.b16 %v755
        %v888 = vunpack.c.l.b16 %v756
        %v889 = vunpack.c.l.b16 %v757
        %v890 = vunpack.c.l.b16 %v758
        %v891 = vunpack.c.l.b16 %v759
        %v892 = vunpack.c.l.b16 %v760
        %v893 = vunpack.c.l.b16 %v761
        %v894 = vunpack.c.l.b16 %v762
        %v895 = vunpack.c.l.b16 %v763
        %v896 = vunpack.c.l.b16 %v764
        %v897 = vunpack.c.l.b16 %v765
        %v898 = vunpack.c.l.b16 %v766
        %v899 = vunpack.c.l.b16 %v767
        %v900 = vunpack.c.l.b16 %v768
        %v901 = vunpack.c.l.b16 %v769
        %v902 = vunpack.c.l.b16 %v770
        %v903 = vunpack.c.l.b16 %v771
        %v904 = vunpack.c.l.b16 %v772
        %v905 = vunpack.c.l.b16 %v773
        %v906 = vunpack.c.l.b16 %v774
        %v907 = vunpack.c.l.b16 %v775
        %v908 = vunpack.c.l.b16 %v776
        %v909 = vunpack.c.l.b16 %v777
        %v910 = vunpack.c.l.b16 %v778
        %v911 = vunpack.c.l.b16 %v779
        %v912 = vunpack.c.l.b16 %v780
        %v913 = vunpack.c.l.b16 %v781
        %v914 = vunpack.c.l.b16 %v782
        %v915 = vunpack.c.l.b16 %v783
        %v916 = vunpack.c.l.b16 %v784
        %v917 = vunpack.c.l.b16 %v785
        %v918 = vunpack.c.l.b16 %v786
        %v919 = vunpack.c.l.b16 %v787
        %v920 = vunpack.c.l.b16 %v788
        %v921 = vunpack.c.l.b16 %v789
        %v922 = vunpack.c.l.b16 %v790
        %v923 = vunpack.c.l.b16 %v791
        %v924 = vpack.c.b16 %v859, %v858
        %v925 = vpack.c.b16 %v861, %v860
        %v926 = vpack.c.b16 %v863, %v862
        %v927 = vpack.c.b16 %v865, %v864
        %v928 = vpack.c.b16 %v867, %v866
        %v929 = vpack.c.b16 %v869, %v868
        %v930 = vpack.c.b16 %v871, %v870
        %v931 = vpack.c.b16 %v873, %v872
        %v932 = vpack.c.b16 %v875, %v874
        %v933 = vpack.c.b16 %v877, %v876
        %v934 = vpack.c.b16 %v879, %v878
        %v935 = vpack.c.b16 %v881, %v880
        %v936 = vpack.c.b16 %v883, %v882
        %v937 = vpack.c.b16 %v885, %v884
        %v938 = vpack.c.b16 %v887, %v886
        %v939 = vpack.c.b16 %v889, %v888
        %v940 = vpack.c.b16 %v891, %v890
        %v941 = vpack.c.b16 %v893, %v892
        %v942 = vpack.c.b16 %v895, %v894
        %v943 = vpack.c.b16 %v897, %v896
        %v944 = vpack.c.b16 %v899, %v898
        %v945 = vpack.c.b16 %v901, %v900
        %v946 = vpack.c.b16 %v903, %v902
        %v947 = vpack.c.b16 %v905, %v904
        %v948 = vpack.c.b16 %v907, %v906
        %v949 = vpack.c.b16 %v909, %v908
        %v950 = vpack.c.b16 %v911, %v910
        %v951 = vpack.c.b16 %v913, %v912
        %v952 = vpack.c.b16 %v915, %v914
        %v953 = vpack.c.b16 %v917, %v916
        %v954 = vpack.c.b16 %v919, %v918
        %v955 = vpack.c.b16 %v921, %v920
        %v956 = vpack.c.b16 %v923, %v922
        %vm990 = vcmask 130048
        %v992 = vsel %vm990, %v659, 0
        %994 = vmatprep.subr.bf16.mxu0 0
        %995 = vmatpush1.bf16.msra.mxu0 %v924
        %996 = vmatprep.subr.bf16.mxu0 0
        %997 = vmatpush1.bf16.msra.mxu0 %v925
        %998 = vmatprep.subr.bf16.mxu0 0
        %999 = vmatpush1.bf16.msra.mxu0 %v926
        %1000 = vmatprep.subr.bf16.mxu0 0
        %1001 = vmatpush1.bf16.msra.mxu0 %v927
        %1002 = vmatprep.subr.bf16.mxu0 0
        %1003 = vmatpush1.bf16.msra.mxu0 %v928
        %1004 = vmatprep.subr.bf16.mxu0 0
        %1005 = vmatpush1.bf16.msra.mxu0 %v929
        %1006 = vmatprep.subr.bf16.mxu0 0
        %1007 = vmatpush1.bf16.msra.mxu0 %v930
        %1008 = vmatprep.subr.bf16.mxu0 0
        %1009 = vmatpush1.bf16.msra.mxu0 %v931
        %1010 = vmatprep.subr.bf16.mxu0 0
        %1011 = vmatpush1.bf16.msra.mxu0 %v932
        %1012 = vmatprep.subr.bf16.mxu0 0
        %1013 = vmatpush1.bf16.msra.mxu0 %v933
        %1014 = vmatprep.subr.bf16.mxu0 0
        %1015 = vmatpush1.bf16.msra.mxu0 %v934
        %1016 = vmatprep.subr.bf16.mxu0 0
        %1017 = vmatpush1.bf16.msra.mxu0 %v935
        %1018 = vmatprep.subr.bf16.mxu0 0
        %1019 = vmatpush1.bf16.msra.mxu0 %v936
        %1020 = vmatprep.subr.bf16.mxu0 0
        %1021 = vmatpush1.bf16.msra.mxu0 %v937
        %1022 = vmatprep.subr.bf16.mxu0 0
        %1023 = vmatpush1.bf16.msra.mxu0 %v938
        %1024 = vmatprep.subr.bf16.mxu0 0
        %1025 = vmatpush1.bf16.msra.mxu0 %v939
        %1026 = vmatprep.mubr.bf16.mxu0 %v656
        %1027 = vmatmul.mubr.bf16.gmra.mrb[0].mxu0 %v655
        %v1028 = vpop.f32.mrb[0].mxu0
        %v1029 = vadd.f32 0.0, %v1028
        %v1030 = vpop.f32.mrb[0].mxu0
        %v1031 = vpop.f32.mrb[0].mxu0
        %v1032 = vadd.f32 0.0, %v1031
        %v1033 = vpop.f32.mrb[0].mxu0
        %1034 = vdwg.mxu0
        %1035 = vmatprep.subr.bf16.mxu0 0
        %1036 = vmatpush1.bf16.msra.mxu0 %v940
        %1037 = vmatprep.subr.bf16.mxu0 0
        %1038 = vmatpush1.bf16.msra.mxu0 %v941
        %1039 = vmatprep.subr.bf16.mxu0 0
        %1040 = vmatpush1.bf16.msra.mxu0 %v942
        %1041 = vmatprep.subr.bf16.mxu0 0
        %1042 = vmatpush1.bf16.msra.mxu0 %v943
        %1043 = vmatprep.subr.bf16.mxu0 0
        %1044 = vmatpush1.bf16.msra.mxu0 %v944
        %1045 = vmatprep.subr.bf16.mxu0 0
        %1046 = vmatpush1.bf16.msra.mxu0 %v945
        %1047 = vmatprep.subr.bf16.mxu0 0
        %1048 = vmatpush1.bf16.msra.mxu0 %v946
        %1049 = vmatprep.subr.bf16.mxu0 0
        %1050 = vmatpush1.bf16.msra.mxu0 %v947
        %1051 = vmatprep.subr.bf16.mxu0 0
        %1052 = vmatpush1.bf16.msra.mxu0 %v948
        %1053 = vmatprep.subr.bf16.mxu0 0
        %1054 = vmatpush1.bf16.msra.mxu0 %v949
        %1055 = vmatprep.subr.bf16.mxu0 0
        %1056 = vmatpush1.bf16.msra.mxu0 %v950
        %1057 = vmatprep.subr.bf16.mxu0 0
        %1058 = vmatpush1.bf16.msra.mxu0 %v951
        %1059 = vmatprep.subr.bf16.mxu0 0
        %1060 = vmatpush1.bf16.msra.mxu0 %v952
        %1061 = vmatprep.subr.bf16.mxu0 0
        %1062 = vmatpush1.bf16.msra.mxu0 %v953
        %1063 = vmatprep.subr.bf16.mxu0 0
        %1064 = vmatpush1.bf16.msra.mxu0 %v954
        %1065 = vmatprep.subr.bf16.mxu0 0
        %1066 = vmatpush1.bf16.msra.mxu0 %v955
        %1067 = vmatprep.mubr.bf16.mxu0 %v658
        %1068 = vmatmul.mubr.bf16.gmra.mrb[0].mxu0 %v657
        %v1069 = vpop.f32.mrb[0].mxu0
        %v1070 = vadd.f32 %v1029, %v1069
        %v1071 = vpop.f32.mrb[0].mxu0
        %v1072 = vpop.f32.mrb[0].mxu0
        %v1073 = vadd.f32 %v1032, %v1072
        %v1074 = vpop.f32.mrb[0].mxu0
        %1075 = vdwg.mxu0
        %1076 = vmatprep.subr.bf16.mxu0 0
        %1077 = vmatpush1.bf16.msra.mxu0 %v956
        %1078 = vmatprep.subr.bf16.mxu0 0
        %1079 = vmatpush1.bf16.msra.mxu0 0
        %1080 = vmatprep.subr.bf16.mxu0 0
        %1081 = vmatpush1.bf16.msra.mxu0 0
        %1082 = vmatprep.subr.bf16.mxu0 0
        %1083 = vmatpush1.bf16.msra.mxu0 0
        %1084 = vmatprep.subr.bf16.mxu0 0
        %1085 = vmatpush1.bf16.msra.mxu0 0
        %1086 = vmatprep.subr.bf16.mxu0 0
        %1087 = vmatpush1.bf16.msra.mxu0 0
        %1088 = vmatprep.subr.bf16.mxu0 0
        %1089 = vmatpush1.bf16.msra.mxu0 0
        %1090 = vmatprep.subr.bf16.mxu0 0
        %1091 = vmatpush1.bf16.msra.mxu0 0
        %1092 = vmatprep.subr.bf16.mxu0 0
        %1093 = vmatpush1.bf16.msra.mxu0 0
        %1094 = vmatprep.subr.bf16.mxu0 0
        %1095 = vmatpush1.bf16.msra.mxu0 0
        %1096 = vmatprep.subr.bf16.mxu0 0
        %1097 = vmatpush1.bf16.msra.mxu0 0
        %1098 = vmatprep.subr.bf16.mxu0 0
        %1099 = vmatpush1.bf16.msra.mxu0 0
        %1100 = vmatprep.subr.bf16.mxu0 0
        %1101 = vmatpush1.bf16.msra.mxu0 0
        %1102 = vmatprep.subr.bf16.mxu0 0
        %1103 = vmatpush1.bf16.msra.mxu0 0
        %1104 = vmatprep.subr.bf16.mxu0 0
        %1105 = vmatpush1.bf16.msra.mxu0 0
        %1106 = vmatprep.subr.bf16.mxu0 0
        %1107 = vmatpush1.bf16.msra.mxu0 0
        %1108 = vmatprep.mubr.bf16.mxu0 0
        %1109 = vmatmul.mubr.bf16.gmra.mrb[0].mxu0 %v992
        %v1110 = vpop.f32.mrb[0].mxu0
        %v1111 = vadd.f32 %v1070, %v1110
        %v1112 = vpop.f32.mrb[0].mxu0
        %v1113 = vpop.f32.mrb[0].mxu0
        %v1114 = vadd.f32 %v1073, %v1113
        %v1115 = vpop.f32.mrb[0].mxu0
        %1116 = vdwg.mxu0
        %v1183 = vunpack.c.l.b16 %v660
        %v1184 = vunpack.c.l.b16 %v661
        %v1185 = vunpack.c.l.b16 %v662
        %v1186 = vunpack.c.l.b16 %v663
        %v1187 = vunpack.c.l.b16 %v664
        %v1188 = vunpack.c.l.b16 %v665
        %v1189 = vunpack.c.l.b16 %v666
        %v1190 = vunpack.c.l.b16 %v667
        %v1191 = vunpack.c.l.b16 %v668
        %v1192 = vunpack.c.l.b16 %v669
        %v1193 = vunpack.c.l.b16 %v670
        %v1194 = vunpack.c.l.b16 %v671
        %v1195 = vunpack.c.l.b16 %v672
        %v1196 = vunpack.c.l.b16 %v673
        %v1197 = vunpack.c.l.b16 %v674
        %v1198 = vunpack.c.l.b16 %v675
        %v1199 = vunpack.c.l.b16 %v676
        %v1200 = vunpack.c.l.b16 %v677
        %v1201 = vunpack.c.l.b16 %v678
        %v1202 = vunpack.c.l.b16 %v679
        %v1203 = vunpack.c.l.b16 %v680
        %v1204 = vunpack.c.l.b16 %v681
        %v1205 = vunpack.c.l.b16 %v682
        %v1206 = vunpack.c.l.b16 %v683
        %v1207 = vunpack.c.l.b16 %v684
        %v1208 = vunpack.c.l.b16 %v685
        %v1209 = vunpack.c.l.b16 %v686
        %v1210 = vunpack.c.l.b16 %v687
        %v1211 = vunpack.c.l.b16 %v688
        %v1212 = vunpack.c.l.b16 %v689
        %v1213 = vunpack.c.l.b16 %v690
        %v1214 = vunpack.c.l.b16 %v691
        %v1215 = vunpack.c.l.b16 %v692
        %v1216 = vunpack.c.l.b16 %v693
        %v1217 = vunpack.c.l.b16 %v694
        %v1218 = vunpack.c.l.b16 %v695
        %v1219 = vunpack.c.l.b16 %v696
        %v1220 = vunpack.c.l.b16 %v697
        %v1221 = vunpack.c.l.b16 %v698
        %v1222 = vunpack.c.l.b16 %v699
        %v1223 = vunpack.c.l.b16 %v700
        %v1224 = vunpack.c.l.b16 %v701
        %v1225 = vunpack.c.l.b16 %v702
        %v1226 = vunpack.c.l.b16 %v703
        %v1227 = vunpack.c.l.b16 %v704
        %v1228 = vunpack.c.l.b16 %v705
        %v1229 = vunpack.c.l.b16 %v706
        %v1230 = vunpack.c.l.b16 %v707
        %v1231 = vunpack.c.l.b16 %v708
        %v1232 = vunpack.c.l.b16 %v709
        %v1233 = vunpack.c.l.b16 %v710
        %v1234 = vunpack.c.l.b16 %v711
        %v1235 = vunpack.c.l.b16 %v712
        %v1236 = vunpack.c.l.b16 %v713
        %v1237 = vunpack.c.l.b16 %v714
        %v1238 = vunpack.c.l.b16 %v715
        %v1239 = vunpack.c.l.b16 %v716
        %v1240 = vunpack.c.l.b16 %v717
        %v1241 = vunpack.c.l.b16 %v718
        %v1242 = vunpack.c.l.b16 %v719
        %v1243 = vunpack.c.l.b16 %v720
        %v1244 = vunpack.c.l.b16 %v721
        %v1245 = vunpack.c.l.b16 %v722
        %v1246 = vunpack.c.l.b16 %v723
        %v1247 = vunpack.c.l.b16 %v724
        %v1248 = vunpack.c.l.b16 %v725
        %v1249 = vpack.c.b16 %v1184, %v1183
        %v1250 = vpack.c.b16 %v1186, %v1185
        %v1251 = vpack.c.b16 %v1188, %v1187
        %v1252 = vpack.c.b16 %v1190, %v1189
        %v1253 = vpack.c.b16 %v1192, %v1191
        %v1254 = vpack.c.b16 %v1194, %v1193
        %v1255 = vpack.c.b16 %v1196, %v1195
        %v1256 = vpack.c.b16 %v1198, %v1197
        %v1257 = vpack.c.b16 %v1200, %v1199
        %v1258 = vpack.c.b16 %v1202, %v1201
        %v1259 = vpack.c.b16 %v1204, %v1203
        %v1260 = vpack.c.b16 %v1206, %v1205
        %v1261 = vpack.c.b16 %v1208, %v1207
        %v1262 = vpack.c.b16 %v1210, %v1209
        %v1263 = vpack.c.b16 %v1212, %v1211
        %v1264 = vpack.c.b16 %v1214, %v1213
        %v1265 = vpack.c.b16 %v1216, %v1215
        %v1266 = vpack.c.b16 %v1218, %v1217
        %v1267 = vpack.c.b16 %v1220, %v1219
        %v1268 = vpack.c.b16 %v1222, %v1221
        %v1269 = vpack.c.b16 %v1224, %v1223
        %v1270 = vpack.c.b16 %v1226, %v1225
        %v1271 = vpack.c.b16 %v1228, %v1227
        %v1272 = vpack.c.b16 %v1230, %v1229
        %v1273 = vpack.c.b16 %v1232, %v1231
        %v1274 = vpack.c.b16 %v1234, %v1233
        %v1275 = vpack.c.b16 %v1236, %v1235
        %v1276 = vpack.c.b16 %v1238, %v1237
        %v1277 = vpack.c.b16 %v1240, %v1239
        %v1278 = vpack.c.b16 %v1242, %v1241
        %v1279 = vpack.c.b16 %v1244, %v1243
        %v1280 = vpack.c.b16 %v1246, %v1245
        %v1281 = vpack.c.b16 %v1248, %v1247
        %1315 = vmatprep.subr.bf16.mxu0 0
        %1316 = vmatpush1.bf16.msra.mxu0 %v1249
        %1317 = vmatprep.subr.bf16.mxu0 0
        %1318 = vmatpush1.bf16.msra.mxu0 %v1250
        %1319 = vmatprep.subr.bf16.mxu0 0
        %1320 = vmatpush1.bf16.msra.mxu0 %v1251
        %1321 = vmatprep.subr.bf16.mxu0 0
        %1322 = vmatpush1.bf16.msra.mxu0 %v1252
        %1323 = vmatprep.subr.bf16.mxu0 0
        %1324 = vmatpush1.bf16.msra.mxu0 %v1253
        %1325 = vmatprep.subr.bf16.mxu0 0
        %1326 = vmatpush1.bf16.msra.mxu0 %v1254
        %1327 = vmatprep.subr.bf16.mxu0 0
        %1328 = vmatpush1.bf16.msra.mxu0 %v1255
        %1329 = vmatprep.subr.bf16.mxu0 0
        %1330 = vmatpush1.bf16.msra.mxu0 %v1256
        %1331 = vmatprep.subr.bf16.mxu0 0
        %1332 = vmatpush1.bf16.msra.mxu0 %v1257
        %1333 = vmatprep.subr.bf16.mxu0 0
        %1334 = vmatpush1.bf16.msra.mxu0 %v1258
        %1335 = vmatprep.subr.bf16.mxu0 0
        %1336 = vmatpush1.bf16.msra.mxu0 %v1259
        %1337 = vmatprep.subr.bf16.mxu0 0
        %1338 = vmatpush1.bf16.msra.mxu0 %v1260
        %1339 = vmatprep.subr.bf16.mxu0 0
        %1340 = vmatpush1.bf16.msra.mxu0 %v1261
        %1341 = vmatprep.subr.bf16.mxu0 0
        %1342 = vmatpush1.bf16.msra.mxu0 %v1262
        %1343 = vmatprep.subr.bf16.mxu0 0
        %1344 = vmatpush1.bf16.msra.mxu0 %v1263
        %1345 = vmatprep.subr.bf16.mxu0 0
        %1346 = vmatpush1.bf16.msra.mxu0 %v1264
        %1347 = vmatprep.mubr.bf16.mxu0 %v656
        %1348 = vmatmul.mubr.bf16.gmra.mrb[0].mxu0 %v655
        %v1349 = vpop.f32.mrb[0].mxu0
        %v1350 = vadd.f32 %v1111, %v1349
        %v1351 = vpop.f32.mrb[0].mxu0
        %v1352 = vpop.f32.mrb[0].mxu0
        %v1353 = vadd.f32 %v1114, %v1352
        %v1354 = vpop.f32.mrb[0].mxu0
        %1355 = vdwg.mxu0
        %1356 = vmatprep.subr.bf16.mxu0 0
        %1357 = vmatpush1.bf16.msra.mxu0 %v1265
        %1358 = vmatprep.subr.bf16.mxu0 0
        %1359 = vmatpush1.bf16.msra.mxu0 %v1266
        %1360 = vmatprep.subr.bf16.mxu0 0
        %1361 = vmatpush1.bf16.msra.mxu0 %v1267
        %1362 = vmatprep.subr.bf16.mxu0 0
        %1363 = vmatpush1.bf16.msra.mxu0 %v1268
        %1364 = vmatprep.subr.bf16.mxu0 0
        %1365 = vmatpush1.bf16.msra.mxu0 %v1269
        %1366 = vmatprep.subr.bf16.mxu0 0
        %1367 = vmatpush1.bf16.msra.mxu0 %v1270
        %1368 = vmatprep.subr.bf16.mxu0 0
        %1369 = vmatpush1.bf16.msra.mxu0 %v1271
        %1370 = vmatprep.subr.bf16.mxu0 0
        %1371 = vmatpush1.bf16.msra.mxu0 %v1272
        %1372 = vmatprep.subr.bf16.mxu0 0
        %1373 = vmatpush1.bf16.msra.mxu0 %v1273
        %1374 = vmatprep.subr.bf16.mxu0 0
        %1375 = vmatpush1.bf16.msra.mxu0 %v1274
        %1376 = vmatprep.subr.bf16.mxu0 0
        %1377 = vmatpush1.bf16.msra.mxu0 %v1275
        %1378 = vmatprep.subr.bf16.mxu0 0
        %1379 = vmatpush1.bf16.msra.mxu0 %v1276
        %1380 = vmatprep.subr.bf16.mxu0 0
        %1381 = vmatpush1.bf16.msra.mxu0 %v1277
        %1382 = vmatprep.subr.bf16.mxu0 0
        %1383 = vmatpush1.bf16.msra.mxu0 %v1278
        %1384 = vmatprep.subr.bf16.mxu0 0
        %1385 = vmatpush1.bf16.msra.mxu0 %v1279
        %1386 = vmatprep.subr.bf16.mxu0 0
        %1387 = vmatpush1.bf16.msra.mxu0 %v1280
        %1388 = vmatprep.mubr.bf16.mxu0 %v658
        %1389 = vmatmul.mubr.bf16.gmra.mrb[0].mxu0 %v657
        %v1390 = vpop.f32.mrb[0].mxu0
        %v1391 = vadd.f32 %v1350, %v1390
        %v1392 = vpop.f32.mrb[0].mxu0
        %v1393 = vpop.f32.mrb[0].mxu0
        %v1394 = vadd.f32 %v1353, %v1393
        %v1395 = vpop.f32.mrb[0].mxu0
        %1396 = vdwg.mxu0
        %1397 = vmatprep.subr.bf16.mxu0 0
        %1398 = vmatpush1.bf16.msra.mxu0 %v1281
        %1399 = vmatprep.subr.bf16.mxu0 0
        %1400 = vmatpush1.bf16.msra.mxu0 0
        %1401 = vmatprep.subr.bf16.mxu0 0
        %1402 = vmatpush1.bf16.msra.mxu0 0
        %1403 = vmatprep.subr.bf16.mxu0 0
        %1404 = vmatpush1.bf16.msra.mxu0 0
        %1405 = vmatprep.subr.bf16.mxu0 0
        %1406 = vmatpush1.bf16.msra.mxu0 0
        %1407 = vmatprep.subr.bf16.mxu0 0
        %1408 = vmatpush1.bf16.msra.mxu0 0
        %1409 = vmatprep.subr.bf16.mxu0 0
        %1410 = vmatpush1.bf16.msra.mxu0 0
        %1411 = vmatprep.subr.bf16.mxu0 0
        %1412 = vmatpush1.bf16.msra.mxu0 0
        %1413 = vmatprep.subr.bf16.mxu0 0
        %1414 = vmatpush1.bf16.msra.mxu0 0
        %1415 = vmatprep.subr.bf16.mxu0 0
        %1416 = vmatpush1.bf16.msra.mxu0 0
        %1417 = vmatprep.subr.bf16.mxu0 0
        %1418 = vmatpush1.bf16.msra.mxu0 0
        %1419 = vmatprep.subr.bf16.mxu0 0
        %1420 = vmatpush1.bf16.msra.mxu0 0
        %1421 = vmatprep.subr.bf16.mxu0 0
        %1422 = vmatpush1.bf16.msra.mxu0 0
        %1423 = vmatprep.subr.bf16.mxu0 0
        %1424 = vmatpush1.bf16.msra.mxu0 0
        %1425 = vmatprep.subr.bf16.mxu0 0
        %1426 = vmatpush1.bf16.msra.mxu0 0
        %1427 = vmatprep.subr.bf16.mxu0 0
        %1428 = vmatpush1.bf16.msra.mxu0 0
        %1429 = vmatprep.mubr.bf16.mxu0 0
        %1430 = vmatmul.mubr.bf16.gmra.mrb[0].mxu0 %v992
        %v1431 = vpop.f32.mrb[0].mxu0
        %v1432 = vadd.f32 %v1391, %v1431
        %v1433 = vpop.f32.mrb[0].mxu0
        %v1434 = vpop.f32.mrb[0].mxu0
        %v1435 = vadd.f32 %v1394, %v1434
        %v1436 = vpop.f32.mrb[0].mxu0
        %1437 = vdwg.mxu0
        %1438 = vst [vmem:[%s291] sm:$0xff] %v1432
        %1439 = vst [vmem:[%s291 + $0x8] sm:$0xff] %v1435
        %s1440 = sand.u32 %s166, 1
        %s1441 = scalar_lea.sflag [#allocation4], %s1440
        %s1442 = sand.u32 %s166, 1
        %s1443 = smul.addr %s1442, 16
        %s1444 = scalar_lea.vmem [#allocation7], %s1443
        // Predicated region
        $region53: #{tpu_custom_call.1} parent=43 // pred_check
          %p1445 = pneg %p176
        $region54: #{tpu_custom_call.1} parent=43 // pred_check_branch
          %1447 = sbr.rel (%p1445) target = $region56
        $region55: #{tpu_custom_call.1} parent=43 // pred_region
          %s1448 = smul.u32 2, %s22
          %s1450 = ssub.s32 256, 256
          %1451 = vsyncadd %s1441, %s1450
          %s1452 = smul.addr %s1448, 128
          %s1453 = scalar_lea.hbm %s6, %s1452
          %s1454 = sshll.u32 %s1444, 4
          %s1455 = int_to_ptr.vmem [resolvable:$true] %s1454
          %1460 = dma.vmem_to_hbm [thread:$0]  %s1455, 256, %s1453, %s1441, 128, 128, 8
        $region56: #{tpu_custom_call.1} parent=43 // pred_fallthru
          _
      $region44: #{tpu_custom_call.1} parent=5 // pred_fallthru
        _
      %p1461 = scmp.le.s32.totalorder 2, %s17
      // Predicated region
      $region57: #{tpu_custom_call.1} parent=5 // pred_check
        %p1462 = pneg %p1461
      $region58: #{tpu_custom_call.1} parent=5 // pred_check_branch
        %1464 = sbr.rel (%p1462) target = $region60
      $region59: #{tpu_custom_call.1} parent=5 // pred_region
        %s1465 = ssub.s32 %s17, 2
        // Predicated region
        $region61: #{tpu_custom_call.1} parent=59 // pred_check
          %p1466 = pneg %p182
        $region62: #{tpu_custom_call.1} parent=59 // pred_check_branch
          %1468 = sbr.rel (%p1466) target = $region64
        $region63: #{tpu_custom_call.1} parent=59 // pred_region
          %s1469 = sand.u32 %s167, 1
          %s1470 = scalar_lea.sflag [#allocation4], %s1469
          %s1471 = sand.u32 %s167, 1
          %s1472 = smul.addr %s1471, 16
          %s1473 = scalar_lea.vmem [#allocation7], %s1472
          %1474 = dma.done %s1470, 256
        $region64: #{tpu_custom_call.1} parent=59 // pred_fallthru
          _
      $region60: #{tpu_custom_call.1} parent=5 // pred_fallthru
        _
    $region6: #{tpu_custom_call.1} parent=1 // loop_footer
      %s21 = sadd.s32 1, %s17
    $region7: #{tpu_custom_call.1} parent=1 // loop_footer_branch
      %16 = sbr.rel target = $region3
    $region8: #{tpu_custom_call.1} parent=1 // loop_exit
      _
    %1475 = vsyncpa [#allocation3], 1
    %s1476 = scalar_lea.sflag [#allocation3], 1
    %1477 = vsyncpa %s1476, 1
    %1478 = vsyncpa [#allocation6], 1
    %1479 = vsyncpa [#allocation4], 1
    %s1480 = scalar_lea.sflag [#allocation4], 1
    %1481 = vsyncpa %s1480, 1

</llo_original>
